<compile_context>
chip_gen: v6e
topology: v6e:2x2x1
jax: 0.10.0
libtpu: 0.0.40
codegen_flags: <defaults>
</compile_context>

<pallas_src>
import functools
import math

import jax
import jax.numpy as jnp
from jax import lax
from jax.experimental import pallas as pl
from jax.experimental.pallas import tpu as pltpu


# -----------------------------------------------------------------------------
# Kernel 1: fused QKV projection (q pre-scaled by 1/sqrt(head_dim), bf16 output)
# -----------------------------------------------------------------------------
def _qkv_proj_kernel(x_ref, w_ref, b_ref, q_ref, k_ref, v_ref, *, n_head):
    # x_ref: (blk, C) input rows; w_ref: (C, 3C) bf16; b_ref: (1, 3C) f32.
    C = x_ref.shape[-1]
    D = C // n_head
    scale = 1.0 / math.sqrt(D)

    x = x_ref[...].astype(jnp.bfloat16)                       # bf16 MXU input
    qkv = jnp.dot(x, w_ref[...], preferred_element_type=jnp.float32)
    qkv = qkv + b_ref[...].astype(jnp.float32)                # (blk, 3C) f32

    q_ref[...] = (qkv[:, 0 * C:1 * C] * scale).astype(jnp.bfloat16)
    k_ref[...] = qkv[:, 1 * C:2 * C].astype(jnp.bfloat16)
    v_ref[...] = qkv[:, 2 * C:3 * C].astype(jnp.bfloat16)


# -----------------------------------------------------------------------------
# Kernel 2: flash attention (online softmax, causal) + fused output projection
# -----------------------------------------------------------------------------
def _flash_attn_proj_kernel(q_ref, k_ref, v_ref, wp_ref, bp_ref, o_ref,
                            m_scr, l_scr, acc_scr, *, n_head):
    # q_ref: (tq, C) bf16 (already scaled); k_ref/v_ref: (tk, C) bf16.
    # wp_ref: (C, C) bf16; bp_ref: (1, C) f32; o_ref: (tq, C).
    # scratch: m_scr/l_scr: (H, tq, 1) f32; acc_scr: (H, tq, D) f32.
    qi = pl.program_id(1)
    ki = pl.program_id(2)
    nk = pl.num_programs(2)

    tq, C = q_ref.shape
    tk = k_ref.shape[0]
    H = n_head
    D = C // H
    NEG = jnp.float32(-1e30)

    @pl.when(ki == 0)
    def _init():
        m_scr[...] = jnp.full(m_scr.shape, NEG, dtype=m_scr.dtype)
        l_scr[...] = jnp.zeros(l_scr.shape, dtype=l_scr.dtype)
        acc_scr[...] = jnp.zeros(acc_scr.shape, dtype=acc_scr.dtype)

    def _update(masked):
        q = q_ref[...]                                         # (tq, C) bf16
        k = k_ref[...]                                         # (tk, C) bf16
        v = v_ref[...]                                         # (tk, C) bf16
        if masked:  # only the diagonal tile needs the per-element causal mask
            row = lax.broadcasted_iota(jnp.int32, (tq, tk), 0)
            col = lax.broadcasted_iota(jnp.int32, (tq, tk), 1)
            keep = col <= row
        for h in range(H):                                     # static head loop
            lo, hi = h * D, (h + 1) * D
            q_h, k_h, v_h = q[:, lo:hi], k[:, lo:hi], v[:, lo:hi]
            # s = q_h @ k_h^T : bf16 inputs, f32 accumulation on the MXU.
            s = lax.dot_general(q_h, k_h, (((1,), (1,)), ((), ())),
                                preferred_element_type=jnp.float32)  # (tq, tk)
            if masked:
                s = jnp.where(keep, s, NEG)
            m_old = m_scr[h]                                   # (tq, 1) f32
            m_new = jnp.maximum(m_old, jnp.max(s, axis=-1, keepdims=True))
            alpha = jnp.exp(m_old - m_new)                     # (tq, 1) f32
            p = jnp.exp(s - m_new)                             # (tq, tk) f32
            l_scr[h] = alpha * l_scr[h] + jnp.sum(p, axis=-1, keepdims=True)
            pv = lax.dot_general(p.astype(jnp.bfloat16), v_h,
                                 (((1,), (0,)), ((), ())),
                                 preferred_element_type=jnp.float32)  # (tq, D)
            acc_scr[h] = alpha * acc_scr[h] + pv
            m_scr[h] = m_new

    # Causal tile skipping: kv tiles above the diagonal do no work at all.
    @pl.when(ki < qi)
    def _off_diag():
        _update(masked=False)

    @pl.when(ki == qi)
    def _diag():
        _update(masked=True)

    # Epilogue (last kv step): normalize, merge heads, fused output projection.
    @pl.when(ki == nk - 1)
    def _epilogue():
        parts = []
        for h in range(H):
            inv_l = pl.reciprocal(l_scr[h], approx=True)       # EUP vrcp, ~free
            parts.append((acc_scr[h] * inv_l).astype(jnp.bfloat16))  # (tq, D)
        y = jnp.concatenate(parts, axis=-1)                    # (tq, C) bf16
        out = lax.dot_general(y, wp_ref[...], (((1,), (0,)), ((), ())),
                              preferred_element_type=jnp.float32)
        out = out + bp_ref[...].astype(jnp.float32)
        o_ref[...] = out.astype(o_ref.dtype)


# -----------------------------------------------------------------------------
# Wrapper
# -----------------------------------------------------------------------------
def _pick_block(T):
    for blk in (256, 128, 64, 32, 16, 8):
        if T % blk == 0:
            return blk
    return T  # fall back to a single full-length block (block == full dim)


def causal_self_attention(x, w_attn, b_attn, w_proj, b_proj, *, n_head,
                          block=None):
    """x: (B,T,C); w_attn: (C,3C); b_attn: (1,3C); w_proj: (C,C); b_proj: (1,C)."""
    B, T, C = x.shape
    assert C % n_head == 0
    D = C // n_head
    blk = _pick_block(T) if block is None else block
    assert T % blk == 0 and (blk % 8 == 0 or blk == T)
    nt = T // blk

    # Ship weights as bf16 (half HBM/VMEM); biases stay f32 (added to f32 acc).
    w_attn_bf = w_attn.astype(jnp.bfloat16)
    w_proj_bf = w_proj.astype(jnp.bfloat16)
    b_attn_f32 = b_attn.astype(jnp.float32)
    b_proj_f32 = b_proj.astype(jnp.float32)

    # ---- Kernel 1: QKV projection --------------------------------------------
    qkv_cost = pl.CostEstimate(
        flops=int(2 * B * T * C * 3 * C),
        transcendentals=0,
        bytes_accessed=int(x.size * x.dtype.itemsize + w_attn_bf.size * 2
                           + 3 * B * T * C * 2),
    )
    q, k, v = pl.pallas_call(
        functools.partial(_qkv_proj_kernel, n_head=n_head),
        out_shape=tuple(jax.ShapeDtypeStruct((B, T, C), jnp.bfloat16)
                        for _ in range(3)),
        grid_spec=pltpu.PrefetchScalarGridSpec(
            num_scalar_prefetch=0,
            grid=(B, nt),
            in_specs=[
                pl.BlockSpec((pl.Squeezed(), blk, C), lambda b, i: (b, i, 0)),
                pl.BlockSpec((C, 3 * C), lambda b, i: (0, 0)),
                pl.BlockSpec((1, 3 * C), lambda b, i: (0, 0)),
            ],
            out_specs=tuple(
                pl.BlockSpec((pl.Squeezed(), blk, C), lambda b, i: (b, i, 0))
                for _ in range(3)),
        ),
        compiler_params=pltpu.CompilerParams(
            dimension_semantics=("parallel", "parallel")),
        cost_estimate=qkv_cost,
    )(x, w_attn_bf, b_attn_f32)

    # ---- Kernel 2: flash attention + output projection ------------------------
    attn_cost = pl.CostEstimate(
        flops=int(2 * B * n_head * T * T * D        # QK^T + PV, causal-halved x2
                  + 2 * B * T * C * C),             # output projection
        transcendentals=int(B * n_head * T * T // 2),
        bytes_accessed=int(3 * B * T * C * 2 + w_proj_bf.size * 2
                           + B * T * C * x.dtype.itemsize),
    )
    # Clamp the kv block index above the diagonal so skipped tiles re-map to an
    # already-resident block (the pipeline dedups the DMA).
    kv_index = lambda b, qi, ki: (b, jnp.minimum(ki, qi), 0)

    out = pl.pallas_call(
        functools.partial(_flash_attn_proj_kernel, n_head=n_head),
        out_shape=jax.ShapeDtypeStruct((B, T, C), x.dtype),
        grid_spec=pltpu.PrefetchScalarGridSpec(
            num_scalar_prefetch=0,
            grid=(B, nt, nt),
            in_specs=[
                pl.BlockSpec((pl.Squeezed(), blk, C),
                             lambda b, qi, ki: (b, qi, 0)),
                pl.BlockSpec((pl.Squeezed(), blk, C), kv_index),
                pl.BlockSpec((pl.Squeezed(), blk, C), kv_index),
                pl.BlockSpec((C, C), lambda b, qi, ki: (0, 0)),
                pl.BlockSpec((1, C), lambda b, qi, ki: (0, 0)),
            ],
            out_specs=pl.BlockSpec((pl.Squeezed(), blk, C),
                                   lambda b, qi, ki: (b, qi, 0)),
            scratch_shapes=[
                pltpu.VMEM((n_head, blk, 1), jnp.float32),   # running max m
                pltpu.VMEM((n_head, blk, 1), jnp.float32),   # running sum l
                pltpu.VMEM((n_head, blk, D), jnp.float32),   # output accumulator
            ],
        ),
        compiler_params=pltpu.CompilerParams(
            dimension_semantics=("parallel", "parallel", "arbitrary")),
        cost_estimate=attn_cost,
    )(q, k, v, w_proj_bf, b_proj_f32)
    return out


# -----------------------------------------------------------------------------
# Pure-JAX f32 reference (mirrors the PyTorch module)
# -----------------------------------------------------------------------------
def _reference(x, w_attn, b_attn, w_proj, b_proj, n_head):
    B, T, C = x.shape
    H, D = n_head, C // n_head
    qkv = x @ w_attn + b_attn
    q, k, v = jnp.split(qkv, 3, axis=-1)
    q = q.reshape(B, T, H, D).transpose(0, 2, 1, 3)
    k = k.reshape(B, T, H, D).transpose(0, 2, 1, 3)
    v = v.reshape(B, T, H, D).transpose(0, 2, 1, 3)
    scores = jnp.einsum('bhtd,bhsd->bhts', q, k) / (D ** 0.5)
    mask = jnp.tril(jnp.ones((T, T), dtype=bool))
    scores = jnp.where(mask[None, None], scores, -jnp.inf)
    p = jax.nn.softmax(scores, axis=-1)
    y = jnp.einsum('bhts,bhsd->bhtd', p, v)
    y = y.transpose(0, 2, 1, 3).reshape(B, T, C)
    return y @ w_proj + b_proj


if __name__ == "__main__":
    # Small config consistent with the module: n_embd=32, n_head=4 (head_dim=8).
    # T=32 with block=8 exercises multi-tile flash iteration, causal tile
    # skipping, the unmasked off-diagonal path, and the masked diagonal path.
    B, T, C, n_head = 2, 32, 32, 4

    key = jax.random.PRNGKey(0)
    kx, k1, k2, k3, k4 = jax.random.split(key, 5)
    bound = 1.0 / (C ** 0.5)
    x = jax.random.normal(kx, (B, T, C), dtype=jnp.float32)
    w_attn = jax.random.uniform(k1, (C, 3 * C), jnp.float32, -bound, bound)
    b_attn = jax.random.uniform(k2, (1, 3 * C), jnp.float32, -bound, bound)
    w_proj = jax.random.uniform(k3, (C, C), jnp.float32, -bound, bound)
    b_proj = jax.random.uniform(k4, (1, C), jnp.float32, -bound, bound)

    out = causal_self_attention(x, w_attn, b_attn, w_proj, b_proj,
                                n_head=n_head, block=8)
    out = jax.block_until_ready(out)

    ref = _reference(x, w_attn, b_attn, w_proj, b_proj, n_head)
    assert out.shape == (B, T, C)
    # bf16 MXU inputs with f32 accumulation -> bf16-level tolerance vs the
    # pure-f32 reference (softmax stats and accumulators are kept in f32).
    assert jnp.allclose(out, ref, atol=2e-2, rtol=2e-2), "mismatch vs JAX reference"

    print("KERNEL_OK")
</pallas_src>

<mosaic_0001>
module attributes {stable_mosaic.version = 11 : i64} {
  func.func @_qkv_proj_kernel(%arg0: i32, %arg1: i32, %arg2: memref<1x8x32xf32, #tpu.memory_space<vmem>>, %arg3: memref<32x96xbf16, #tpu.memory_space<vmem>>, %arg4: memref<1x96xf32, #tpu.memory_space<vmem>>, %arg5: memref<1x8x32xbf16, #tpu.memory_space<vmem>>, %arg6: memref<1x8x32xbf16, #tpu.memory_space<vmem>>, %arg7: memref<1x8x32xbf16, #tpu.memory_space<vmem>>) attributes {dimension_semantics = [#tpu.dimension_semantics<parallel>, #tpu.dimension_semantics<parallel>], iteration_bounds = array<i64: 2, 4>, scalar_prefetch = 0 : i64, scratch_operands = 0 : i64, tpu.core_type = #tpu.core_type<tc>, window_params = [{transform_indices = @transform_0, window_bounds = array<i64: 1, 8, 32>}, {pipeline_mode = #tpu.pipeline_mode<synchronous>, transform_indices = @transform_1, window_bounds = array<i64: 32, 96>}, {pipeline_mode = #tpu.pipeline_mode<synchronous>, transform_indices = @transform_2, window_bounds = array<i64: 1, 96>}, {transform_indices = @transform_3, window_bounds = array<i64: 1, 8, 32>}, {transform_indices = @transform_4, window_bounds = array<i64: 1, 8, 32>}, {transform_indices = @transform_5, window_bounds = array<i64: 1, 8, 32>}]} {
    %c0 = arith.constant 0 : index
    %c0_0 = arith.constant 0 : index
    %c0_1 = arith.constant 0 : index
    %0 = vector.load %arg2[%c0, %c0_0, %c0_1] : memref<1x8x32xf32, #tpu.memory_space<vmem>>, vector<1x8x32xf32>
    %1 = vector.shape_cast %0 : vector<1x8x32xf32> to vector<8x32xf32>
    %2 = arith.truncf %1 : vector<8x32xf32> to vector<8x32xbf16>
    %c0_2 = arith.constant 0 : index
    %c0_3 = arith.constant 0 : index
    %3 = vector.load %arg3[%c0_2, %c0_3] : memref<32x96xbf16, #tpu.memory_space<vmem>>, vector<32x96xbf16>
    %cst = arith.constant dense<0.000000e+00> : vector<8x96xf32>
    %4 = tpu.matmul %2, %3, %cst {dimension_numbers = #tpu.dot_dimension_numbers<[1], [0], [0], [1], [0, 0, 1, 1], [], []>} : vector<8x32xbf16>, vector<32x96xbf16>, vector<8x96xf32> -> vector<8x96xf32>
    %c0_4 = arith.constant 0 : index
    %c0_5 = arith.constant 0 : index
    %5 = vector.load %arg4[%c0_4, %c0_5] : memref<1x96xf32, #tpu.memory_space<vmem>>, vector<1x96xf32>
    %6 = vector.broadcast %5 : vector<1x96xf32> to vector<8x96xf32>
    %7 = arith.addf %4, %6 : vector<8x96xf32>
    %8 = vector.extract_strided_slice %7 {offsets = [0, 0], sizes = [8, 32], strides = [1, 1]} : vector<8x96xf32> to vector<8x32xf32>
    %cst_6 = arith.constant 0.353553385 : f32
    %9 = vector.broadcast %cst_6 : f32 to vector<8x32xf32>
    %10 = arith.mulf %8, %9 : vector<8x32xf32>
    %11 = arith.truncf %10 : vector<8x32xf32> to vector<8x32xbf16>
    %c0_7 = arith.constant 0 : index
    %c0_8 = arith.constant 0 : index
    %c0_9 = arith.constant 0 : index
    %12 = vector.load %arg5[%c0_7, %c0_8, %c0_9] : memref<1x8x32xbf16, #tpu.memory_space<vmem>>, vector<1x8x32xbf16>
    %13 = vector.shape_cast %12 : vector<1x8x32xbf16> to vector<8x32xbf16>
    %14 = vector.shape_cast %11 : vector<8x32xbf16> to vector<1x8x32xbf16>
    tpu.vector_store %arg5[%c0_7, %c0_8, %c0_9], %14 {strides = array<i32>} : memref<1x8x32xbf16, #tpu.memory_space<vmem>>, vector<1x8x32xbf16>,
    %15 = vector.extract_strided_slice %7 {offsets = [0, 32], sizes = [8, 32], strides = [1, 1]} : vector<8x96xf32> to vector<8x32xf32>
    %16 = arith.truncf %15 : vector<8x32xf32> to vector<8x32xbf16>
    %c0_10 = arith.constant 0 : index
    %c0_11 = arith.constant 0 : index
    %c0_12 = arith.constant 0 : index
    %17 = vector.load %arg6[%c0_10, %c0_11, %c0_12] : memref<1x8x32xbf16, #tpu.memory_space<vmem>>, vector<1x8x32xbf16>
    %18 = vector.shape_cast %17 : vector<1x8x32xbf16> to vector<8x32xbf16>
    %19 = vector.shape_cast %16 : vector<8x32xbf16> to vector<1x8x32xbf16>
    tpu.vector_store %arg6[%c0_10, %c0_11, %c0_12], %19 {strides = array<i32>} : memref<1x8x32xbf16, #tpu.memory_space<vmem>>, vector<1x8x32xbf16>,
    %20 = vector.extract_strided_slice %7 {offsets = [0, 64], sizes = [8, 32], strides = [1, 1]} : vector<8x96xf32> to vector<8x32xf32>
    %21 = arith.truncf %20 : vector<8x32xf32> to vector<8x32xbf16>
    %c0_13 = arith.constant 0 : index
    %c0_14 = arith.constant 0 : index
    %c0_15 = arith.constant 0 : index
    %22 = vector.load %arg7[%c0_13, %c0_14, %c0_15] : memref<1x8x32xbf16, #tpu.memory_space<vmem>>, vector<1x8x32xbf16>
    %23 = vector.shape_cast %22 : vector<1x8x32xbf16> to vector<8x32xbf16>
    %24 = vector.shape_cast %21 : vector<8x32xbf16> to vector<1x8x32xbf16>
    tpu.vector_store %arg7[%c0_13, %c0_14, %c0_15], %24 {strides = array<i32>} : memref<1x8x32xbf16, #tpu.memory_space<vmem>>, vector<1x8x32xbf16>,
    return
  }
  func.func @transform_0(%arg0: i32, %arg1: i32) -> (i32, i32, i32) {
    %c0_i32 = arith.constant 0 : i32
    %c0_i32_0 = arith.constant 0 : i32
    return %arg0, %arg1, %c0_i32 : i32, i32, i32
  }
  func.func @transform_1(%arg0: i32, %arg1: i32) -> (i32, i32) {
    %c0_i32 = arith.constant 0 : i32
    %c0_i32_0 = arith.constant 0 : i32
    %c0_i32_1 = arith.constant 0 : i32
    return %c0_i32, %c0_i32_0 : i32, i32
  }
  func.func @transform_2(%arg0: i32, %arg1: i32) -> (i32, i32) {
    %c0_i32 = arith.constant 0 : i32
    %c0_i32_0 = arith.constant 0 : i32
    %c0_i32_1 = arith.constant 0 : i32
    return %c0_i32, %c0_i32_0 : i32, i32
  }
  func.func @transform_3(%arg0: i32, %arg1: i32) -> (i32, i32, i32) {
    %c0_i32 = arith.constant 0 : i32
    %c0_i32_0 = arith.constant 0 : i32
    return %arg0, %arg1, %c0_i32 : i32, i32, i32
  }
  func.func @transform_4(%arg0: i32, %arg1: i32) -> (i32, i32, i32) {
    %c0_i32 = arith.constant 0 : i32
    %c0_i32_0 = arith.constant 0 : i32
    return %arg0, %arg1, %c0_i32 : i32, i32, i32
  }
  func.func @transform_5(%arg0: i32, %arg1: i32) -> (i32, i32, i32) {
    %c0_i32 = arith.constant 0 : i32
    %c0_i32_0 = arith.constant 0 : i32
    return %arg0, %arg1, %c0_i32 : i32, i32, i32
  }
}

</mosaic_0001>

<llo_original>
// kernel: tpu_custom_call.1
$region0: #{tpu_custom_call.1}
  #allocation0 [shape = 'u32[]', space=smem, size = 0x4, offset = 0x4, fixed_abs, tag = 'smem constant byte address 0x4 - core index']
  #allocation1 [shape = 'u32[144,128]{1,0:T(1,128)}', space=vmem, size = 0x12000, scoped, tag = 'internal scratch']
  %s0 = inlined_call_operand.hbm [shape: f32[2,32,32], index: 0, kind: input, shape index: {}]
  %s1 = inlined_call_operand.hbm [shape: bf16[32,96], index: 1, kind: input, shape index: {}]
  %s2 = inlined_call_operand.vmem [shape: f32[1,96], index: 2, kind: input, shape index: {}]
  %s3 = inlined_call_operand.hbm [shape: bf16[2,32,32], index: 3, kind: output, shape index: {0}]
  %s4 = inlined_call_operand.hbm [shape: bf16[2,32,32], index: 4, kind: output, shape index: {1}]
  %s5 = inlined_call_operand.hbm [shape: bf16[2,32,32], index: 5, kind: output, shape index: {2}]
  %6 = xla_tuple %s3, %s4, %s5
  %s7 = sld [smem:[#allocation0]]
  $region69: #{tpu_custom_call.1} parent=0
    _
  %s9 = ssub.s32 1, %s7
  %s10 = scalar_select 0, %s9, %s7
  $region1: #{tpu_custom_call.1} parent=0
    #allocation2 [shape = 'u8[8192]{0}', space=vmem, size = 0x2000, scoped, tag = 'input window, operand 0']
    #allocation3 [shape = 's32[2]{0}', space=sflag, size = 0x8, scoped, tag = 'scoped memory for tpu_custom_call.1']
    #allocation4 [shape = 's32[2]{0}', space=sflag, size = 0x8, scoped, tag = 'scoped memory for tpu_custom_call.1']
    #allocation5 [shape = 'u8[8192]{0}', space=vmem, size = 0x2000, scoped, tag = 'input window, operand 1, single buffered']
    #allocation6 [shape = 's32[1]{0}', space=sflag, size = 0x4, scoped, tag = 'scoped memory for tpu_custom_call.1']
    #allocation7 [shape = 'u8[4096]{0}', space=vmem, size = 0x1000, scoped, tag = 'output window, operand 0']
    #allocation8 [shape = 'u8[4096]{0}', space=vmem, size = 0x1000, scoped, tag = 'output window, operand 1']
    #allocation9 [shape = 's32[2]{0}', space=sflag, size = 0x8, scoped, tag = 'scoped memory for tpu_custom_call.1']
    #allocation10 [shape = 'u8[4096]{0}', space=vmem, size = 0x1000, scoped, tag = 'output window, operand 2']
    %11 = vsyncpa [#allocation3], 0
    %s12 = scalar_lea.sflag [#allocation3], 1
    %13 = vsyncpa %s12, 0
    %14 = vsyncpa [#allocation6], 0
    %15 = vsyncpa [#allocation4], 0
    %s16 = scalar_lea.sflag [#allocation4], 1
    %17 = vsyncpa %s16, 0
    %18 = vsyncpa [#allocation9], 0
    %s19 = scalar_lea.sflag [#allocation9], 1
    %20 = vsyncpa %s19, 0
    loop: start=0, step=1, limit=10
    $region2: #{tpu_custom_call.1} parent=1 // loop_pre_header
      _
    $region3: #{tpu_custom_call.1} parent=1 // loop_header
      %s22 = sphi 0, %s26
      %p23 = scmp.ge.s32.totalorder %s22, 10
      %s29 = sphi 0, %s41
      %s30 = sphi 0, %s37
      %s31 = sphi 0, %s29
      %s32 = sphi 0, %s30
      %s33 = sphi 0, %s31
      %s34 = sphi 0, %s32
      %s46 = sphi 0, %s48
      %s49 = sphi 0, %s46
      %s50 = sphi 0, %s49
      %s66 = sphi 0, %s50
      %s70 = sphi 0, %s70
      %s72 = sphi 0, %s70
      %s73 = sphi 0, %s72
      %s87 = sphi 0, %s73
      %s91 = sphi 0, %s91
      %s93 = sphi 0, %s91
      %s94 = sphi 0, %s93
      %s108 = sphi 0, %s94
      %s116 = sphi 0, %s118
      %s119 = sphi 0, %s116
      %s120 = sphi 0, %s119
      %s136 = sphi 0, %s120
      %s144 = sphi 0, %s146
      %s147 = sphi 0, %s144
      %s148 = sphi 0, %s147
      %s164 = sphi 0, %s148
      %s172 = sphi 0, %s174
      %s175 = sphi 0, %s172
      %s176 = sphi 0, %s175
      %s192 = sphi 0, %s176
    $region4: #{tpu_custom_call.1} parent=1 // loop_header_branch
      %25 = sbr.rel (%p23) target = $region8
    $region5: #{tpu_custom_call.1} parent=1 // loop_body
      %s27 = ssub.s32 %s22, 1
      %s28 = ssub.s32 %s22, 2
      %s35 = sadd.s32 1, %s30
      %p36 = scmp.ge.s32.totalorder %s35, 4
      %s37 = scalar_select %p36, 0, %s35
      %s38 = sadd.s32 1, %s29
      %s39 = scalar_select %p36, %s38, %s29
      %p40 = scmp.ge.s32.totalorder %s39, 2
      %s41 = scalar_select %p40, 0, %s39
      %s42 = ssub.s32 %s29, %s41
      %s43 = ssub.s32 %s30, %s37
      %s44 = sor.u32 %s42, %s43
      %p45 = scmp.eq.s32.totalorder %s44, 0
      %s47 = sadd.s32 %s46, 1
      %s48 = scalar_select %p45, %s46, %s47
      %p51 = pneg %p45
      %p52 = scmp.eq.s32.totalorder %s22, 7
      %p53 = por %p51, %p52
      %p54 = scmp.ne.s32.totalorder %s46, %s49
      %p55 = scmp.eq.s32.totalorder %s22, 0
      %p56 = por %p54, %p55
      %p57 = scmp.ne.s32.totalorder %s46, %s49
      %p58 = scmp.eq.s32.totalorder %s27, 7
      %p59 = por %p57, %p58
      %p60 = scmp.ne.s32.totalorder %s49, %s50
      %p61 = scmp.eq.s32.totalorder %s27, 0
      %p62 = por %p60, %p61
      %p63 = scmp.ne.s32.totalorder %s49, %s50
      %p64 = scmp.eq.s32.totalorder %s28, 7
      %p65 = por %p63, %p64
      %p67 = scmp.ne.s32.totalorder %s50, %s66
      %p68 = scmp.eq.s32.totalorder %s28, 0
      %p69 = por %p67, %p68
      %s71 = sadd.s32 %s70, 1
      %p74 = scmp.eq.s32.totalorder %s22, 7
      %p75 = scmp.ne.s32.totalorder %s70, %s72
      %p76 = scmp.eq.s32.totalorder %s22, 0
      %p77 = por %p75, %p76
      %p78 = scmp.ne.s32.totalorder %s70, %s72
      %p79 = scmp.eq.s32.totalorder %s27, 7
      %p80 = por %p78, %p79
      %p81 = scmp.ne.s32.totalorder %s72, %s73
      %p82 = scmp.eq.s32.totalorder %s27, 0
      %p83 = por %p81, %p82
      %p84 = scmp.ne.s32.totalorder %s72, %s73
      %p85 = scmp.eq.s32.totalorder %s28, 7
      %p86 = por %p84, %p85
      %p88 = scmp.ne.s32.totalorder %s73, %s87
      %p89 = scmp.eq.s32.totalorder %s28, 0
      %p90 = por %p88, %p89
      %s92 = sadd.s32 %s91, 1
      %p95 = scmp.eq.s32.totalorder %s22, 7
      %p96 = scmp.ne.s32.totalorder %s91, %s93
      %p97 = scmp.eq.s32.totalorder %s22, 0
      %p98 = por %p96, %p97
      %p99 = scmp.ne.s32.totalorder %s91, %s93
      %p100 = scmp.eq.s32.totalorder %s27, 7
      %p101 = por %p99, %p100
      %p102 = scmp.ne.s32.totalorder %s93, %s94
      %p103 = scmp.eq.s32.totalorder %s27, 0
      %p104 = por %p102, %p103
      %p105 = scmp.ne.s32.totalorder %s93, %s94
      %p106 = scmp.eq.s32.totalorder %s28, 7
      %p107 = por %p105, %p106
      %p109 = scmp.ne.s32.totalorder %s94, %s108
      %p110 = scmp.eq.s32.totalorder %s28, 0
      %p111 = por %p109, %p110
      %s112 = ssub.s32 %s29, %s41
      %s113 = ssub.s32 %s30, %s37
      %s114 = sor.u32 %s112, %s113
      %p115 = scmp.eq.s32.totalorder %s114, 0
      %s117 = sadd.s32 %s116, 1
      %s118 = scalar_select %p115, %s116, %s117
      %p121 = pneg %p115
      %p122 = scmp.eq.s32.totalorder %s22, 7
      %p123 = por %p121, %p122
      %p124 = scmp.ne.s32.totalorder %s116, %s119
      %p125 = scmp.eq.s32.totalorder %s22, 0
      %p126 = por %p124, %p125
      %p127 = scmp.ne.s32.totalorder %s116, %s119
      %p128 = scmp.eq.s32.totalorder %s27, 7
      %p129 = por %p127, %p128
      %p130 = scmp.ne.s32.totalorder %s119, %s120
      %p131 = scmp.eq.s32.totalorder %s27, 0
      %p132 = por %p130, %p131
      %p133 = scmp.ne.s32.totalorder %s119, %s120
      %p134 = scmp.eq.s32.totalorder %s28, 7
      %p135 = por %p133, %p134
      %p137 = scmp.ne.s32.totalorder %s120, %s136
      %p138 = scmp.eq.s32.totalorder %s28, 0
      %p139 = por %p137, %p138
      %s140 = ssub.s32 %s29, %s41
      %s141 = ssub.s32 %s30, %s37
      %s142 = sor.u32 %s140, %s141
      %p143 = scmp.eq.s32.totalorder %s142, 0
      %s145 = sadd.s32 %s144, 1
      %s146 = scalar_select %p143, %s144, %s145
      %p149 = pneg %p143
      %p150 = scmp.eq.s32.totalorder %s22, 7
      %p151 = por %p149, %p150
      %p152 = scmp.ne.s32.totalorder %s144, %s147
      %p153 = scmp.eq.s32.totalorder %s22, 0
      %p154 = por %p152, %p153
      %p155 = scmp.ne.s32.totalorder %s144, %s147
      %p156 = scmp.eq.s32.totalorder %s27, 7
      %p157 = por %p155, %p156
      %p158 = scmp.ne.s32.totalorder %s147, %s148
      %p159 = scmp.eq.s32.totalorder %s27, 0
      %p160 = por %p158, %p159
      %p161 = scmp.ne.s32.totalorder %s147, %s148
      %p162 = scmp.eq.s32.totalorder %s28, 7
      %p163 = por %p161, %p162
      %p165 = scmp.ne.s32.totalorder %s148, %s164
      %p166 = scmp.eq.s32.totalorder %s28, 0
      %p167 = por %p165, %p166
      %s168 = ssub.s32 %s29, %s41
      %s169 = ssub.s32 %s30, %s37
      %s170 = sor.u32 %s168, %s169
      %p171 = scmp.eq.s32.totalorder %s170, 0
      %s173 = sadd.s32 %s172, 1
      %s174 = scalar_select %p171, %s172, %s173
      %p177 = pneg %p171
      %p178 = scmp.eq.s32.totalorder %s22, 7
      %p179 = por %p177, %p178
      %p180 = scmp.ne.s32.totalorder %s172, %s175
      %p181 = scmp.eq.s32.totalorder %s22, 0
      %p182 = por %p180, %p181
      %p183 = scmp.ne.s32.totalorder %s172, %s175
      %p184 = scmp.eq.s32.totalorder %s27, 7
      %p185 = por %p183, %p184
      %p186 = scmp.ne.s32.totalorder %s175, %s176
      %p187 = scmp.eq.s32.totalorder %s27, 0
      %p188 = por %p186, %p187
      %p189 = scmp.ne.s32.totalorder %s175, %s176
      %p190 = scmp.eq.s32.totalorder %s28, 7
      %p191 = por %p189, %p190
      %p193 = scmp.ne.s32.totalorder %s176, %s192
      %p194 = scmp.eq.s32.totalorder %s28, 0
      %p195 = por %p193, %p194
      %p196 = scmp.le.s32.totalorder 1, %s22
      %p197 = scmp.lt.s32.totalorder %s22, 9
      %p198 = pnand %p196, %p197
      %p199 = pneg %p198
      // Predicated region
      $region9: #{tpu_custom_call.1} parent=5 // pred_check
        _
      $region10: #{tpu_custom_call.1} parent=5 // pred_check_branch
        %201 = sbr.rel (%p198) target = $region12
      $region11: #{tpu_custom_call.1} parent=5 // pred_region
        %s202 = ssub.s32 %s22, 1
        // Predicated region
        $region13: #{tpu_custom_call.1} parent=11 // pred_check
          %p203 = pneg %p83
        $region14: #{tpu_custom_call.1} parent=11 // pred_check_branch
          %205 = sbr.rel (%p203) target = $region16
        $region15: #{tpu_custom_call.1} parent=11 // pred_region
          %s207 = ssub.s32 256, 256
          %208 = vsyncadd [#allocation6], %s207
          %s209 = sshll.u32 [#allocation5], 4
          %s210 = int_to_ptr.vmem [resolvable:$true] %s209
          %215 = dma.hbm_to_vmem [thread:$0]  %s1, 256, %s210, [#allocation6], 64, 64, 4
        $region16: #{tpu_custom_call.1} parent=11 // pred_fallthru
          _
        // Predicated region
        $region17: #{tpu_custom_call.1} parent=11 // pred_check
          %p216 = pneg %p104
        $region18: #{tpu_custom_call.1} parent=11 // pred_check_branch
          %218 = sbr.rel (%p216) target = $region20
        $region19: #{tpu_custom_call.1} parent=11 // pred_region
          _
        $region20: #{tpu_custom_call.1} parent=11 // pred_fallthru
          _
      $region12: #{tpu_custom_call.1} parent=5 // pred_fallthru
        _
      %p219 = scmp.lt.s32.totalorder %s22, 8
      // Predicated region
      $region21: #{tpu_custom_call.1} parent=5 // pred_check
        %p220 = pneg %p219
      $region22: #{tpu_custom_call.1} parent=5 // pred_check_branch
        %222 = sbr.rel (%p220) target = $region24
      $region23: #{tpu_custom_call.1} parent=5 // pred_region
        // Predicated region
        $region25: #{tpu_custom_call.1} parent=23 // pred_check
          %p223 = pneg %p56
        $region26: #{tpu_custom_call.1} parent=23 // pred_check_branch
          %225 = sbr.rel (%p223) target = $region28
        $region27: #{tpu_custom_call.1} parent=23 // pred_region
          %s226 = sand.u32 %s46, 1
          %s227 = scalar_lea.sflag [#allocation3], %s226
          %s228 = sand.u32 %s46, 1
          %s229 = smul.addr %s228, 8
          %s230 = scalar_lea.vmem [#allocation2], %s229
          %s232 = ssub.s32 128, 128
          %233 = vsyncadd %s227, %s232
          %s234 = smul.addr %s29, 4
          %s235 = sadd.s32 %s30, %s234
          %s236 = smul.addr %s235, 128
          %s237 = scalar_lea.hbm %s0, %s236
          %s239 = sshll.u32 %s230, 4
          %s240 = int_to_ptr.vmem [resolvable:$true] %s239
          %242 = dma.hbm_to_vmem [thread:$0]  %s237, 128, %s240, %s227
        $region28: #{tpu_custom_call.1} parent=23 // pred_fallthru
          _
      $region24: #{tpu_custom_call.1} parent=5 // pred_fallthru
        _
      %p243 = scmp.le.s32.totalorder 1, %s22
      %p244 = scmp.lt.s32.totalorder %s22, 9
      %p245 = pnand %p243, %p244
      %p246 = pneg %p245
      // Predicated region
      $region29: #{tpu_custom_call.1} parent=5 // pred_check
        _
      $region30: #{tpu_custom_call.1} parent=5 // pred_check_branch
        %248 = sbr.rel (%p245) target = $region32
      $region31: #{tpu_custom_call.1} parent=5 // pred_region
        %s249 = ssub.s32 %s22, 1
        %s250 = sand.u32 %s49, 1
        %s251 = scalar_lea.sflag [#allocation3], %s250
        %s252 = sand.u32 %s49, 1
        %s253 = smul.addr %s252, 8
        %s254 = scalar_lea.vmem [#allocation2], %s253
        // Predicated region
        $region33: #{tpu_custom_call.1} parent=31 // pred_check
          %p255 = pneg %p62
        $region34: #{tpu_custom_call.1} parent=31 // pred_check_branch
          %257 = sbr.rel (%p255) target = $region36
        $region35: #{tpu_custom_call.1} parent=31 // pred_region
          %258 = dma.done %s251, 128
        $region36: #{tpu_custom_call.1} parent=31 // pred_fallthru
          _
        // Predicated region
        $region37: #{tpu_custom_call.1} parent=31 // pred_check
          %p259 = pneg %p83
        $region38: #{tpu_custom_call.1} parent=31 // pred_check_branch
          %261 = sbr.rel (%p259) target = $region40
        $region39: #{tpu_custom_call.1} parent=31 // pred_region
          %262 = dma.done [#allocation6], 256
        $region40: #{tpu_custom_call.1} parent=31 // pred_fallthru
          _
        %s263 = sand.u32 %s49, 1
        %s264 = scalar_lea.sflag [#allocation3], %s263
        %s265 = sand.u32 %s49, 1
        %s266 = smul.addr %s265, 8
        %s267 = scalar_lea.vmem [#allocation2], %s266
        %p268 = pneg %p62
        %p269 = pneg %p59
        %p270 = pneg %p83
        %p271 = pneg %p80
        %p272 = pneg %p104
        %p273 = pneg %p101
        %p274 = pneg %p132
        %p275 = pneg %p129
        %s276 = sand.u32 %s119, 1
        %s277 = scalar_lea.sflag [#allocation4], %s276
        %s278 = sand.u32 %s119, 1
        %s279 = smul.addr %s278, 4
        %s280 = scalar_lea.vmem [#allocation7], %s279
        %p281 = pneg %p160
        %p282 = pneg %p157
        %s283 = sand.u32 %s27, 1
        %s284 = scalar_lea.sflag [#allocation9], %s283
        %s285 = sand.u32 %s147, 1
        %s286 = smul.addr %s285, 4
        %s287 = scalar_lea.vmem [#allocation8], %s286
        %p288 = pneg %p188
        %p289 = pneg %p185
        %s290 = sand.u32 %s27, 1
        %s291 = scalar_lea.sflag [#allocation9], %s290
        %s292 = sand.u32 %s175, 1
        %s293 = smul.addr %s292, 4
        %s294 = scalar_lea.vmem [#allocation10], %s293
        %v296 = vld [vmem:[%s254] sm:$0xff]
        %v297 = vpack.c.bf16 %v296, %v296
        %v298 = vld [vmem:[#allocation5] sm:$0xf]
        %v299 = vld [vmem:[#allocation5 + $0x4] sm:$0xf]
        %v300 = vld [vmem:[#allocation5 + $0x8] sm:$0xf]
        %v301 = vld [vmem:[#allocation5 + $0xc] sm:$0xf]
        %v302 = vld [vmem:[%s2] sm:$0x1]
        %v304 = vlaneseq
        %v305 = vshrl.u32 %v304, 7
        %v306 = vsub.s32 0, %v305
        %v307 = vrot.slane %v302, %v306
        %v313 = vunpack.c.l.b16 %v298
        %v314 = vunpack.c.l.b16 %v299
        %v315 = vunpack.c.l.b16 %v300
        %v316 = vunpack.c.l.b16 %v301
        %v317 = vpack.c.b16 %v314, %v313
        %v318 = vpack.c.b16 %v316, %v315
        %vm321 = vcmask 261120
        %v323 = vsel %vm321, %v297, 0
        %325 = vmatprep.subr.bf16.mxu0 0
        %326 = vmatpush1.bf16.msra.mxu0 0
        %327 = vmatprep.subr.bf16.mxu0 0
        %328 = vmatpush1.bf16.msra.mxu0 0
        %329 = vmatprep.subr.bf16.mxu0 0
        %330 = vmatpush1.bf16.msra.mxu0 0
        %331 = vmatprep.subr.bf16.mxu0 0
        %332 = vmatpush1.bf16.msra.mxu0 0
        %333 = vmatprep.subr.bf16.mxu0 0
        %334 = vmatpush1.bf16.msra.mxu0 0
        %335 = vmatprep.subr.bf16.mxu0 0
        %336 = vmatpush1.bf16.msra.mxu0 0
        %337 = vmatprep.subr.bf16.mxu0 0
        %338 = vmatpush1.bf16.msra.mxu0 %v318
        %339 = vmatprep.subr.bf16.mxu0 0
        %340 = vmatpush1.bf16.msra.mxu0 %v317
        %341 = vmatprep.subr.bf16.mxu0 0
        %342 = vmatpush2.bf16.msra.mxu0 0
        %343 = vmatprep.subr.bf16.mxu0 0
        %344 = vmatpush2.bf16.msra.mxu0 0
        %345 = vmatprep.subr.bf16.mxu0 0
        %346 = vmatpush2.bf16.msra.mxu0 0
        %347 = vmatprep.subr.bf16.mxu0 0
        %348 = vmatpush2.bf16.msra.mxu0 0
        %349 = vmatprep.subr.bf16.mxu0 0
        %350 = vmatpush2.bf16.msra.mxu0 0
        %351 = vmatprep.subr.bf16.mxu0 0
        %352 = vmatpush2.bf16.msra.mxu0 0
        %353 = vmatprep.subr.bf16.mxu0 0
        %354 = vmatpush2.bf16.msra.mxu0 0
        %355 = vmatprep.subr.bf16.mxu0 0
        %356 = vmatpush2.bf16.msra.mxu0 0
        %357 = vmatprep.mubr.bf16.mxu0 0
        %358 = vmatmul.mubr.bf16.gmra.mxu0 %v323
        %v359 = vpop.f32.mrf.mxu0
        %v360 = vadd.f32 %v307, %v359
        %v361 = vpop.f32.mrf.mxu0
        %v362 = vpop.f32.mrf.mxu0
        %v363 = vpop.f32.mrf.mxu0
        %364 = vdwg.mxu0
        %v365 = vmul.f32 %v360, 0.35355338
        %v366 = vpack.c.bf16 %v365, %v365
        %vm367 = vcmask 257024
        %368 = vst.msk [vmem:[%s280] sm:$0xf] %vm367, %v366
        %v369 = vpack.c.bf16 %v360, %v360
        %v371 = vunpack.c.l.b16 %v369
        %v372 = vpack.c.b16 %v371, %v371
        %373 = vrot.lane.b32.xlu0 %v372, 96
        %v374 = vpop.permute.xlu0 %373
        %376 = vst.msk [vmem:[%s287] sm:$0xf] %vm367, %v374
        %377 = vrot.lane.b32.xlu0 %v372, 64
        %v378 = vpop.permute.xlu0 %377
        %380 = vst.msk [vmem:[%s294] sm:$0xf] %vm367, %v378
        %s381 = sand.u32 %s119, 1
        %s382 = scalar_lea.sflag [#allocation4], %s381
        %s383 = sand.u32 %s119, 1
        %s384 = smul.addr %s383, 4
        %s385 = scalar_lea.vmem [#allocation7], %s384
        %s386 = sand.u32 %s27, 1
        %s387 = scalar_lea.sflag [#allocation9], %s386
        %s388 = sand.u32 %s147, 1
        %s389 = smul.addr %s388, 4
        %s390 = scalar_lea.vmem [#allocation8], %s389
        %s391 = sand.u32 %s27, 1
        %s392 = scalar_lea.sflag [#allocation9], %s391
        %s393 = sand.u32 %s175, 1
        %s394 = smul.addr %s393, 4
        %s395 = scalar_lea.vmem [#allocation10], %s394
        // Predicated region
        $region41: #{tpu_custom_call.1} parent=31 // pred_check
          %p396 = pneg %p129
        $region42: #{tpu_custom_call.1} parent=31 // pred_check_branch
          %398 = sbr.rel (%p396) target = $region44
        $region43: #{tpu_custom_call.1} parent=31 // pred_region
          %s400 = ssub.s32 64, 64
          %401 = vsyncadd %s382, %s400
          %s402 = smul.addr %s31, 4
          %s403 = sadd.s32 %s32, %s402
          %s404 = smul.addr %s403, 64
          %s405 = scalar_lea.hbm %s3, %s404
          %s407 = sshll.u32 %s385, 4
          %s408 = int_to_ptr.vmem [resolvable:$true] %s407
          %410 = dma.vmem_to_hbm [thread:$0]  %s408, 64, %s405, %s382
        $region44: #{tpu_custom_call.1} parent=31 // pred_fallthru
          _
        // Predicated region
        $region45: #{tpu_custom_call.1} parent=31 // pred_check
          %p411 = pneg %p157
        $region46: #{tpu_custom_call.1} parent=31 // pred_check_branch
          %413 = sbr.rel (%p411) target = $region48
        $region47: #{tpu_custom_call.1} parent=31 // pred_region
          %s415 = ssub.s32 64, 64
          %416 = vsyncadd %s387, %s415
          %s417 = smul.addr %s31, 4
          %s418 = sadd.s32 %s32, %s417
          %s419 = smul.addr %s418, 64
          %s420 = scalar_lea.hbm %s4, %s419
          %s422 = sshll.u32 %s390, 4
          %s423 = int_to_ptr.vmem [resolvable:$true] %s422
          %425 = dma.vmem_to_hbm [thread:$0]  %s423, 64, %s420, %s387
        $region48: #{tpu_custom_call.1} parent=31 // pred_fallthru
          _
        // Predicated region
        $region49: #{tpu_custom_call.1} parent=31 // pred_check
          %p426 = pneg %p185
        $region50: #{tpu_custom_call.1} parent=31 // pred_check_branch
          %428 = sbr.rel (%p426) target = $region52
        $region51: #{tpu_custom_call.1} parent=31 // pred_region
          %s430 = ssub.s32 64, 64
          %431 = vsyncadd %s392, %s430
          %s432 = smul.addr %s31, 4
          %s433 = sadd.s32 %s32, %s432
          %s434 = smul.addr %s433, 64
          %s435 = scalar_lea.hbm %s5, %s434
          %s437 = sshll.u32 %s395, 4
          %s438 = int_to_ptr.vmem [resolvable:$true] %s437
          %440 = dma.vmem_to_hbm [thread:$0]  %s438, 64, %s435, %s392
        $region52: #{tpu_custom_call.1} parent=31 // pred_fallthru
          _
      $region32: #{tpu_custom_call.1} parent=5 // pred_fallthru
        _
      %p441 = scmp.le.s32.totalorder 2, %s22
      // Predicated region
      $region53: #{tpu_custom_call.1} parent=5 // pred_check
        %p442 = pneg %p441
      $region54: #{tpu_custom_call.1} parent=5 // pred_check_branch
        %444 = sbr.rel (%p442) target = $region56
      $region55: #{tpu_custom_call.1} parent=5 // pred_region
        %s445 = ssub.s32 %s22, 2
        // Predicated region
        $region57: #{tpu_custom_call.1} parent=55 // pred_check
          %p446 = pneg %p135
        $region58: #{tpu_custom_call.1} parent=55 // pred_check_branch
          %448 = sbr.rel (%p446) target = $region60
        $region59: #{tpu_custom_call.1} parent=55 // pred_region
          %s449 = sand.u32 %s120, 1
          %s450 = scalar_lea.sflag [#allocation4], %s449
          %s451 = sand.u32 %s120, 1
          %s452 = smul.addr %s451, 4
          %s453 = scalar_lea.vmem [#allocation7], %s452
          %454 = dma.done %s450, 64
        $region60: #{tpu_custom_call.1} parent=55 // pred_fallthru
          _
        // Predicated region
        $region61: #{tpu_custom_call.1} parent=55 // pred_check
          %p455 = pneg %p163
        $region62: #{tpu_custom_call.1} parent=55 // pred_check_branch
          %457 = sbr.rel (%p455) target = $region64
        $region63: #{tpu_custom_call.1} parent=55 // pred_region
          %s458 = sand.u32 %s28, 1
          %s459 = scalar_lea.sflag [#allocation9], %s458
          %s460 = sand.u32 %s148, 1
          %s461 = smul.addr %s460, 4
          %s462 = scalar_lea.vmem [#allocation8], %s461
          %463 = dma.done %s459, 64
        $region64: #{tpu_custom_call.1} parent=55 // pred_fallthru
          _
        // Predicated region
        $region65: #{tpu_custom_call.1} parent=55 // pred_check
          %p464 = pneg %p191
        $region66: #{tpu_custom_call.1} parent=55 // pred_check_branch
          %466 = sbr.rel (%p464) target = $region68
        $region67: #{tpu_custom_call.1} parent=55 // pred_region
          %s467 = sand.u32 %s28, 1
          %s468 = scalar_lea.sflag [#allocation9], %s467
          %s469 = sand.u32 %s176, 1
          %s470 = smul.addr %s469, 4
          %s471 = scalar_lea.vmem [#allocation10], %s470
          %472 = dma.done %s468, 64
        $region68: #{tpu_custom_call.1} parent=55 // pred_fallthru
          _
      $region56: #{tpu_custom_call.1} parent=5 // pred_fallthru
        _
    $region6: #{tpu_custom_call.1} parent=1 // loop_footer
      %s26 = sadd.s32 1, %s22
    $region7: #{tpu_custom_call.1} parent=1 // loop_footer_branch
      %21 = sbr.rel target = $region3
    $region8: #{tpu_custom_call.1} parent=1 // loop_exit
      _
    %473 = vsyncpa [#allocation3], 1
    %s474 = scalar_lea.sflag [#allocation3], 1
    %475 = vsyncpa %s474, 1
    %476 = vsyncpa [#allocation6], 1
    %477 = vsyncpa [#allocation4], 1
    %s478 = scalar_lea.sflag [#allocation4], 1
    %479 = vsyncpa %s478, 1
    %480 = vsyncpa [#allocation9], 1
    %s481 = scalar_lea.sflag [#allocation9], 1
    %482 = vsyncpa %s481, 1

</llo_original>
